<compile_context>
chip_gen: v7x
topology: tpu7x:2x2x1
jax: 0.10.0
libtpu: 0.0.40
codegen_flags: <defaults>
</compile_context>

<pallas_src>
import functools

import jax
import jax.numpy as jnp
from jax.experimental import pallas as pl
from jax.experimental.pallas import tpu as pltpu

IMAGENET_MEAN = [0.485, 0.456, 0.406]
IMAGENET_STD = [0.229, 0.224, 0.225]

# Per-channel affine constants, computed in double precision on host:
#   (x / 255 - mean) / std  ==  x * scale + bias
_SCALE_PER_CHANNEL = tuple(1.0 / (255.0 * s) for s in IMAGENET_STD)
_BIAS_PER_CHANNEL = tuple(-m / s for m, s in zip(IMAGENET_MEAN, IMAGENET_STD))

_LANE = 128
_MIN_GRID_STEPS = 4          # enough steps for prefetch/writeback overlap
_VMEM_HARD_CAP = 48 << 20    # stay under v7x's 64 MiB physical VMEM


def _normalize_kernel(x_ref, o_ref, *, block_rows, scales, biases):
    """o = x * scale[channel] + bias[channel], channel = global_row % 3."""
    row0 = pl.program_id(0) * block_rows
    rows = row0 + jax.lax.broadcasted_iota(jnp.int32, (block_rows, 1), 0)
    ch = rows % 3
    s0, s1, s2 = scales
    b0, b1, b2 = biases
    scale = jnp.where(ch == 0, s0, jnp.where(ch == 1, s1, s2)).astype(jnp.float32)
    bias = jnp.where(ch == 0, b0, jnp.where(ch == 1, b1, b2)).astype(jnp.float32)
    x = x_ref[...].astype(jnp.float32)
    o_ref[...] = (x * scale + bias).astype(o_ref.dtype)


def _round_down(n, m):
    return (n // m) * m


def _largest_aligned_divisor(n, limit, align):
    """Largest d with n % d == 0, d % align == 0, d <= limit; 0 if none."""
    d = _round_down(min(n, limit), align)
    while d >= align:
        if n % d == 0:
            return d
        d -= align
    return 0


def _pick_tiles(n_rows, n_cols, cell_bytes, sub_req, budget_bytes):
    """Choose (block_rows, block_cols) obeying TPU tiling rules:
    rows is a multiple of `sub_req` or equals n_rows; cols is a multiple of
    128 or equals n_cols. Blocks fit `budget_bytes` (in+out) and the grid has
    at least _MIN_GRID_STEPS steps whenever the shapes allow it."""
    min_rows = n_rows if n_rows < sub_req else sub_req

    # --- columns: full H*W unless we must split for VMEM or pipeline depth ---
    bc = n_cols
    if n_cols % _LANE == 0 and n_cols > _LANE:
        max_row_steps = max(1, n_rows // min_rows)
        over_budget = min_rows * n_cols * cell_bytes > budget_bytes
        too_few_steps = max_row_steps < _MIN_GRID_STEPS
        if over_budget or too_few_steps:
            by_budget = _round_down(budget_bytes // max(1, min_rows * cell_bytes), _LANE)
            want_steps = -(-_MIN_GRID_STEPS // max_row_steps)  # ceil
            by_steps = _round_down(n_cols // max(1, want_steps), _LANE)
            target = min(n_cols, by_budget, by_steps if too_few_steps else n_cols)
            target = max(_LANE, target)
            bc = _largest_aligned_divisor(n_cols, target, _LANE) or _LANE
    n_col_blocks = -(-n_cols // bc)

    # --- rows: as many as fit the budget, aligned, prefer exact divisors ---
    if n_rows <= sub_req:
        br = n_rows                      # full extent (allowed even if < sub_req)
    else:
        by_budget = max(sub_req, _round_down(budget_bytes // (bc * cell_bytes), sub_req))
        want_row_steps = max(1, -(-_MIN_GRID_STEPS // n_col_blocks))
        by_steps = max(sub_req, _round_down(n_rows // want_row_steps, sub_req))
        limit = min(by_budget, by_steps)
        br = _largest_aligned_divisor(n_rows, limit, sub_req)
        if br == 0:
            # No aligned exact divisor: take an aligned size; only the final
            # block is partial (masked stores on that block alone).
            br = max(sub_req, _round_down(min(n_rows, limit), sub_req))
    return br, bc


def imagenet_transform(x, out_dtype=None, vmem_block_budget_bytes=6 * 1024 * 1024):
    """x: (B, 3, H, W), pixels in [0, 255] (float or uint8).
    Returns (x/255 - mean) / std.

    out_dtype defaults to x.dtype for float inputs and float32 for integer
    inputs; pass jnp.bfloat16 to cut HBM write traffic further."""
    B, C, H, W = x.shape
    assert C == 3, "ImagenetTransform is defined for 3-channel (RGB) images"

    in_dtype = jnp.dtype(x.dtype)
    if out_dtype is None:
        out_dtype = jnp.dtype(jnp.float32) if jnp.issubdtype(in_dtype, jnp.integer) else in_dtype
    else:
        out_dtype = jnp.dtype(out_dtype)

    BC, HW = B * C, H * W
    x2 = x.reshape(BC, HW)

    in_sz = in_dtype.itemsize
    out_sz = out_dtype.itemsize
    cell_bytes = in_sz + out_sz
    # sublane packing requirement of the narrowest dtype touching a block:
    # f32 -> 8, bf16 -> 16, u8/i8 -> 32 rows per tile.
    sub_req = max(8, 32 // min(in_sz, out_sz, 4))

    br, bc = _pick_tiles(BC, HW, cell_bytes, sub_req, int(vmem_block_budget_bytes))
    grid = (pl.cdiv(BC, br), pl.cdiv(HW, bc))

    block_bytes = br * bc * cell_bytes
    # Double-buffered in+out footprint plus slack; keep under v7x physical VMEM.
    vmem_limit = 2 * block_bytes + (4 << 20)
    assert vmem_limit <= _VMEM_HARD_CAP, (
        f"block budget too large: {block_bytes} B/block needs ~{vmem_limit} B VMEM "
        f"(> {_VMEM_HARD_CAP} B); lower vmem_block_budget_bytes")
    vmem_limit = int(min(_VMEM_HARD_CAP, max(16 << 20, vmem_limit)))

    kernel = functools.partial(
        _normalize_kernel,
        block_rows=br,
        scales=_SCALE_PER_CHANNEL,
        biases=_BIAS_PER_CHANNEL,
    )

    out = pl.pallas_call(
        kernel,
        out_shape=jax.ShapeDtypeStruct((BC, HW), out_dtype),
        grid=grid,
        in_specs=[pl.BlockSpec((br, bc), lambda i, j: (i, j))],
        out_specs=pl.BlockSpec((br, bc), lambda i, j: (i, j)),
        compiler_params=pltpu.CompilerParams(
            dimension_semantics=("parallel", "parallel"),
            vmem_limit_bytes=vmem_limit,
        ),
    )(x2)
    return out.reshape(B, C, H, W)


class ImagenetTransform:
    """JAX/Pallas equivalent of the PyTorch ImagenetTransform module."""

    def __init__(self, resol):
        self.resol = resol  # mean/std are folded into compile-time scale/bias

    def __call__(self, x, out_dtype=None):
        assert x.shape[-2:] == (self.resol, self.resol)
        return imagenet_transform(x, out_dtype=out_dtype)


if __name__ == "__main__":
    B, C, R = 2, 3, 16  # module hard-codes 3 channels (ImageNet mean/std)
    key = jax.random.PRNGKey(0)
    # pixels normalized to [0, 255]
    x = jax.random.uniform(key, (B, C, R, R), dtype=jnp.float32) * 255.0

    mod = ImagenetTransform(R)
    out = jax.block_until_ready(mod(x))

    # reference check in plain JAX (exact formula from the PyTorch module)
    mean = jnp.asarray(IMAGENET_MEAN, jnp.float32).reshape(1, 3, 1, 1)
    std = jnp.asarray(IMAGENET_STD, jnp.float32).reshape(1, 3, 1, 1)
    ref = (x / 255.0 - mean) / std
    assert out.dtype == x.dtype
    assert jnp.allclose(out, ref, atol=1e-5, rtol=1e-5), "f32 mismatch vs reference"

    # uint8 fast path: widened in-kernel, output now correctly defaults to f32
    x_u8 = jnp.round(x).astype(jnp.uint8)
    out_u8 = jax.block_until_ready(mod(x_u8))
    ref_u8 = (x_u8.astype(jnp.float32) / 255.0 - mean) / std
    assert out_u8.dtype == jnp.float32
    assert jnp.allclose(out_u8, ref_u8, atol=1e-4, rtol=1e-4), "u8 mismatch vs reference"

    print("KERNEL_OK")
</pallas_src>

<mosaic_0001>
module attributes {stable_mosaic.version = 11 : i64} {
  func.func @_normalize_kernel(%arg0: i32, %arg1: i32, %arg2: memref<6x128xf32, #tpu.memory_space<vmem>>, %arg3: memref<6x128xf32, #tpu.memory_space<vmem>>) attributes {dimension_semantics = [#tpu.dimension_semantics<parallel>, #tpu.dimension_semantics<parallel>], iteration_bounds = array<i64: 1, 2>, scalar_prefetch = 0 : i64, scratch_operands = 0 : i64, tpu.core_type = #tpu.core_type<tc>, window_params = [{transform_indices = @transform_0, window_bounds = array<i64: 6, 128>}, {transform_indices = @transform_1, window_bounds = array<i64: 6, 128>}]} {
    %c6_i32 = arith.constant 6 : i32
    %0 = arith.muli %arg0, %c6_i32 : i32
    %1 = tpu.iota {dimensions = array<i32: 0>} : vector<6x1xi32>
    %2 = vector.broadcast %0 : i32 to vector<6x1xi32>
    %3 = arith.addi %2, %1 : vector<6x1xi32>
    %c3_i32 = arith.constant 3 : i32
    %c0_i32 = arith.constant 0 : i32
    %4 = arith.cmpi eq, %c3_i32, %c0_i32 : i32
    %c1_i32 = arith.constant 1 : i32
    %5 = arith.select %4, %c1_i32, %c3_i32 : i32
    %6 = vector.broadcast %5 : i32 to vector<6x1xi32>
    %7 = arith.remsi %3, %6 : vector<6x1xi32>
    %c0_i32_0 = arith.constant 0 : i32
    %8 = vector.broadcast %c0_i32_0 : i32 to vector<6x1xi32>
    %9 = arith.cmpi ne, %7, %8 : vector<6x1xi32>
    %c0_i32_1 = arith.constant 0 : i32
    %10 = vector.broadcast %c0_i32_1 : i32 to vector<6x1xi32>
    %11 = arith.cmpi slt, %7, %10 : vector<6x1xi32>
    %c0_i32_2 = arith.constant 0 : i32
    %12 = arith.cmpi slt, %5, %c0_i32_2 : i32
    %13 = vector.broadcast %12 : i1 to vector<6x1xi1>
    %14 = vector.broadcast %13 : vector<6x1xi1> to vector<6x1xi1>
    %15 = arith.xori %11, %14 : vector<6x1xi1>
    %16 = arith.andi %15, %9 : vector<6x1xi1>
    %17 = vector.broadcast %5 : i32 to vector<6x1xi32>
    %18 = arith.addi %7, %17 : vector<6x1xi32>
    %19 = arith.select %16, %18, %7 : vector<6x1xi1>, vector<6x1xi32>
    %c0_i32_3 = arith.constant 0 : i32
    %20 = vector.broadcast %c0_i32_3 : i32 to vector<6x1xi32>
    %21 = arith.cmpi eq, %19, %20 : vector<6x1xi32>
    %c1_i32_4 = arith.constant 1 : i32
    %22 = vector.broadcast %c1_i32_4 : i32 to vector<6x1xi32>
    %23 = arith.cmpi eq, %19, %22 : vector<6x1xi32>
    %cst = arith.constant 0.0175070036 : f32
    %cst_5 = arith.constant 0.0174291935 : f32
    %24 = vector.broadcast %cst : f32 to vector<6x1xf32>
    %25 = vector.broadcast %cst_5 : f32 to vector<6x1xf32>
    %26 = arith.select %23, %24, %25 : vector<6x1xi1>, vector<6x1xf32>
    %cst_6 = arith.constant 0.0171247534 : f32
    %27 = vector.broadcast %cst_6 : f32 to vector<6x1xf32>
    %28 = arith.select %21, %27, %26 : vector<6x1xi1>, vector<6x1xf32>
    %c0_i32_7 = arith.constant 0 : i32
    %29 = vector.broadcast %c0_i32_7 : i32 to vector<6x1xi32>
    %30 = arith.cmpi eq, %19, %29 : vector<6x1xi32>
    %c1_i32_8 = arith.constant 1 : i32
    %31 = vector.broadcast %c1_i32_8 : i32 to vector<6x1xi32>
    %32 = arith.cmpi eq, %19, %31 : vector<6x1xi32>
    %cst_9 = arith.constant -2.03571439 : f32
    %cst_10 = arith.constant -1.80444443 : f32
    %33 = vector.broadcast %cst_9 : f32 to vector<6x1xf32>
    %34 = vector.broadcast %cst_10 : f32 to vector<6x1xf32>
    %35 = arith.select %32, %33, %34 : vector<6x1xi1>, vector<6x1xf32>
    %cst_11 = arith.constant -2.11790395 : f32
    %36 = vector.broadcast %cst_11 : f32 to vector<6x1xf32>
    %37 = arith.select %30, %36, %35 : vector<6x1xi1>, vector<6x1xf32>
    %c0 = arith.constant 0 : index
    %c0_12 = arith.constant 0 : index
    %38 = vector.load %arg2[%c0, %c0_12] : memref<6x128xf32, #tpu.memory_space<vmem>>, vector<6x128xf32>
    %39 = vector.broadcast %28 : vector<6x1xf32> to vector<6x128xf32>
    %40 = arith.mulf %38, %39 : vector<6x128xf32>
    %41 = vector.broadcast %37 : vector<6x1xf32> to vector<6x128xf32>
    %42 = arith.addf %40, %41 : vector<6x128xf32>
    %c0_13 = arith.constant 0 : index
    %c0_14 = arith.constant 0 : index
    %43 = vector.load %arg3[%c0_13, %c0_14] : memref<6x128xf32, #tpu.memory_space<vmem>>, vector<6x128xf32>
    tpu.vector_store %arg3[%c0_13, %c0_14], %42 {strides = array<i32>} : memref<6x128xf32, #tpu.memory_space<vmem>>, vector<6x128xf32>,
    return
  }
  func.func @transform_0(%arg0: i32, %arg1: i32) -> (i32, i32) {
    %c0_i32 = arith.constant 0 : i32
    return %arg0, %arg1 : i32, i32
  }
  func.func @transform_1(%arg0: i32, %arg1: i32) -> (i32, i32) {
    %c0_i32 = arith.constant 0 : i32
    return %arg0, %arg1 : i32, i32
  }
}

</mosaic_0001>

<llo_original>
// kernel: tpu_custom_call.1
$region0: #{tpu_custom_call.1}
  #allocation0 [shape = 'u32[]', space=smem, size = 0x4, offset = 0x4, fixed_abs, tag = 'smem constant byte address 0x4 - core index']
  #allocation1 [shape = 'u32[144,128]{1,0:T(1,128)}', space=vmem, size = 0x12000, scoped, tag = 'internal scratch']
  %s0 = inlined_call_operand.hbm [shape: f32[6,256], index: 0, kind: input, shape index: {}]
  %s1 = inlined_call_operand.hbm [shape: f32[6,256], index: 1, kind: output, shape index: {}]
  %s2 = sld [smem:[#allocation0]]
  $region41: #{tpu_custom_call.1} parent=0
    _
  %s4 = ssub.s32 1, %s2
  %s5 = scalar_select 0, %s4, %s2
  $region1: #{tpu_custom_call.1} parent=0
    #allocation2 [shape = 'u8[8192]{0}', space=vmem, size = 0x2000, scoped, tag = 'input window, operand 0']
    #allocation3 [shape = 's32[2]{0}', space=sflag, size = 0x8, scoped, tag = 'scoped memory for tpu_custom_call.1']
    #allocation4 [shape = 's32[2]{0}', space=sflag, size = 0x8, scoped, tag = 'scoped memory for tpu_custom_call.1']
    #allocation5 [shape = 'u8[8192]{0}', space=vmem, size = 0x2000, scoped, tag = 'output window, operand 0']
    %6 = vsyncpa [#allocation3], 0
    %s7 = scalar_lea.sflag [#allocation3], 1
    %8 = vsyncpa %s7, 0
    %9 = vsyncpa [#allocation4], 0
    %s10 = scalar_lea.sflag [#allocation4], 1
    %11 = vsyncpa %s10, 0
    loop: start=0, step=1, limit=4
    $region2: #{tpu_custom_call.1} parent=1 // loop_pre_header
      _
    $region3: #{tpu_custom_call.1} parent=1 // loop_header
      %s13 = sphi 0, %s17
      %p14 = scmp.ge.s32.totalorder %s13, 4
      %s20 = sphi 0, %s32
      %s21 = sphi 0, %s28
      %s22 = sphi 0, %s20
      %s23 = sphi 0, %s21
      %s24 = sphi 0, %s22
      %s25 = sphi 0, %s23
      %s37 = sphi 0, %s39
      %s40 = sphi 0, %s37
      %s41 = sphi 0, %s40
      %s57 = sphi 0, %s41
      %s65 = sphi 0, %s67
      %s68 = sphi 0, %s65
      %s69 = sphi 0, %s68
      %s85 = sphi 0, %s69
    $region4: #{tpu_custom_call.1} parent=1 // loop_header_branch
      %16 = sbr.rel (%p14) target = $region8
    $region5: #{tpu_custom_call.1} parent=1 // loop_body
      %s18 = ssub.s32 %s13, 1
      %s19 = ssub.s32 %s13, 2
      %s26 = sadd.s32 1, %s21
      %p27 = scmp.ge.s32.totalorder %s26, 2
      %s28 = scalar_select %p27, 0, %s26
      %s29 = sadd.s32 1, %s20
      %s30 = scalar_select %p27, %s29, %s20
      %p31 = scmp.ge.s32.totalorder %s30, 1
      %s32 = scalar_select %p31, 0, %s30
      %s33 = ssub.s32 %s20, %s32
      %s34 = ssub.s32 %s21, %s28
      %s35 = sor.u32 %s33, %s34
      %p36 = scmp.eq.s32.totalorder %s35, 0
      %s38 = sadd.s32 %s37, 1
      %s39 = scalar_select %p36, %s37, %s38
      %p42 = pneg %p36
      %p43 = scmp.eq.s32.totalorder %s13, 1
      %p44 = por %p42, %p43
      %p45 = scmp.ne.s32.totalorder %s37, %s40
      %p46 = scmp.eq.s32.totalorder %s13, 0
      %p47 = por %p45, %p46
      %p48 = scmp.ne.s32.totalorder %s37, %s40
      %p49 = scmp.eq.s32.totalorder %s18, 1
      %p50 = por %p48, %p49
      %p51 = scmp.ne.s32.totalorder %s40, %s41
      %p52 = scmp.eq.s32.totalorder %s18, 0
      %p53 = por %p51, %p52
      %p54 = scmp.ne.s32.totalorder %s40, %s41
      %p55 = scmp.eq.s32.totalorder %s19, 1
      %p56 = por %p54, %p55
      %p58 = scmp.ne.s32.totalorder %s41, %s57
      %p59 = scmp.eq.s32.totalorder %s19, 0
      %p60 = por %p58, %p59
      %s61 = ssub.s32 %s20, %s32
      %s62 = ssub.s32 %s21, %s28
      %s63 = sor.u32 %s61, %s62
      %p64 = scmp.eq.s32.totalorder %s63, 0
      %s66 = sadd.s32 %s65, 1
      %s67 = scalar_select %p64, %s65, %s66
      %p70 = pneg %p64
      %p71 = scmp.eq.s32.totalorder %s13, 1
      %p72 = por %p70, %p71
      %p73 = scmp.ne.s32.totalorder %s65, %s68
      %p74 = scmp.eq.s32.totalorder %s13, 0
      %p75 = por %p73, %p74
      %p76 = scmp.ne.s32.totalorder %s65, %s68
      %p77 = scmp.eq.s32.totalorder %s18, 1
      %p78 = por %p76, %p77
      %p79 = scmp.ne.s32.totalorder %s68, %s69
      %p80 = scmp.eq.s32.totalorder %s18, 0
      %p81 = por %p79, %p80
      %p82 = scmp.ne.s32.totalorder %s68, %s69
      %p83 = scmp.eq.s32.totalorder %s19, 1
      %p84 = por %p82, %p83
      %p86 = scmp.ne.s32.totalorder %s69, %s85
      %p87 = scmp.eq.s32.totalorder %s19, 0
      %p88 = por %p86, %p87
      %p89 = scmp.le.s32.totalorder 1, %s13
      %p90 = scmp.lt.s32.totalorder %s13, 3
      %p91 = pnand %p89, %p90
      %p92 = pneg %p91
      // Predicated region
      $region9: #{tpu_custom_call.1} parent=5 // pred_check
        _
      $region10: #{tpu_custom_call.1} parent=5 // pred_check_branch
        %94 = sbr.rel (%p91) target = $region12
      $region11: #{tpu_custom_call.1} parent=5 // pred_region
        %s95 = ssub.s32 %s13, 1
      $region12: #{tpu_custom_call.1} parent=5 // pred_fallthru
        _
      %p96 = scmp.lt.s32.totalorder %s13, 2
      // Predicated region
      $region13: #{tpu_custom_call.1} parent=5 // pred_check
        %p97 = pneg %p96
      $region14: #{tpu_custom_call.1} parent=5 // pred_check_branch
        %99 = sbr.rel (%p97) target = $region16
      $region15: #{tpu_custom_call.1} parent=5 // pred_region
        // Predicated region
        $region17: #{tpu_custom_call.1} parent=15 // pred_check
          %p100 = pneg %p47
        $region18: #{tpu_custom_call.1} parent=15 // pred_check_branch
          %102 = sbr.rel (%p100) target = $region20
        $region19: #{tpu_custom_call.1} parent=15 // pred_region
          %s103 = sand.u32 %s37, 1
          %s104 = scalar_lea.sflag [#allocation3], %s103
          %s105 = sand.u32 %s37, 1
          %s106 = smul.addr %s105, 8
          %s107 = scalar_lea.vmem [#allocation2], %s106
          %s109 = ssub.s32 128, 128
          %110 = vsyncadd %s104, %s109
          %s111 = smul.addr %s20, 2
          %s112 = sadd.s32 %s21, %s111
          %s113 = smul.addr %s112, 128
          %s114 = scalar_lea.hbm %s0, %s113
          %s116 = sshll.u32 %s107, 4
          %s117 = int_to_ptr.vmem [resolvable:$true] %s116
          %119 = dma.hbm_to_vmem [thread:$0]  %s114, 128, %s117, %s104
        $region20: #{tpu_custom_call.1} parent=15 // pred_fallthru
          _
      $region16: #{tpu_custom_call.1} parent=5 // pred_fallthru
        _
      %p120 = scmp.le.s32.totalorder 1, %s13
      %p121 = scmp.lt.s32.totalorder %s13, 3
      %p122 = pnand %p120, %p121
      %p123 = pneg %p122
      // Predicated region
      $region21: #{tpu_custom_call.1} parent=5 // pred_check
        _
      $region22: #{tpu_custom_call.1} parent=5 // pred_check_branch
        %125 = sbr.rel (%p122) target = $region24
      $region23: #{tpu_custom_call.1} parent=5 // pred_region
        %s126 = ssub.s32 %s13, 1
        %s127 = sand.u32 %s40, 1
        %s128 = scalar_lea.sflag [#allocation3], %s127
        %s129 = sand.u32 %s40, 1
        %s130 = smul.addr %s129, 8
        %s131 = scalar_lea.vmem [#allocation2], %s130
        // Predicated region
        $region25: #{tpu_custom_call.1} parent=23 // pred_check
          %p132 = pneg %p53
        $region26: #{tpu_custom_call.1} parent=23 // pred_check_branch
          %134 = sbr.rel (%p132) target = $region28
        $region27: #{tpu_custom_call.1} parent=23 // pred_region
          %135 = dma.done %s128, 128
        $region28: #{tpu_custom_call.1} parent=23 // pred_fallthru
          _
        %s136 = sand.u32 %s40, 1
        %s137 = scalar_lea.sflag [#allocation3], %s136
        %s138 = sand.u32 %s40, 1
        %s139 = smul.addr %s138, 8
        %s140 = scalar_lea.vmem [#allocation2], %s139
        %p141 = pneg %p53
        %p142 = pneg %p50
        %p143 = pneg %p81
        %p144 = pneg %p78
        %s145 = sand.u32 %s68, 1
        %s146 = scalar_lea.sflag [#allocation4], %s145
        %s147 = sand.u32 %s68, 1
        %s148 = smul.addr %s147, 8
        %s149 = scalar_lea.vmem [#allocation5], %s148
        %s150 = smul.u32 %s22, 6
        %v151 = vlaneseq
        %v152 = vshrl.u32 %v151, 7
        %v153 = vstv %s150
        %v154 = vadd.s32 %v153, %v152
        %vm155 = vcmp.lt.s32.totalorder %v154, 0
        %v156 = vsub.s32 0, %v154
        %v157 = vsel %vm155, %v156, %v154
        %v158 = vmul.u32.u64.compose %v157, 2863311531
        %v159 = vextract.low.u32 %v158
        %v160 = vextract.high.u32 %v158
        %v161 = vshrl.u32 %v160, 1
        %v162 = vmul.u32 %v161, 3
        %v163 = vsub.s32 %v157, %v162
        %v164 = vsub.s32 0, %v163
        %v165 = vsel %vm155, %v164, %v163
        %vm166 = vcmp.ne.s32.totalorder %v165, 0
        %vm167 = vcmp.lt.s32.totalorder %v165, 0
        %vm168 = vmand %vm167, %vm166
        %v169 = vadd.s32 %v165, 3
        %v170 = vsel %vm168, %v169, %v165
        %vm171 = vcmp.eq.s32.totalorder %v170, 0
        %vm172 = vcmp.eq.s32.totalorder %v170, 1
        %v173 = vsel %vm172, 0.017507004, 0.017429193
        %v174 = vsel %vm171, 0.017124753, %v173
        %v175 = vsel %vm172, -2.0357144, -1.8044444
        %v176 = vsel %vm171, -2.117904, %v175
        %v177 = vld [vmem:[%s131] sm:$0x3f]
        %v178 = vmul.f32 %v177, %v174
        %v179 = vadd.f32 %v178, %v176
        %180 = vst [vmem:[%s149] sm:$0x3f] %v179
        %s181 = sand.u32 %s68, 1
        %s182 = scalar_lea.sflag [#allocation4], %s181
        %s183 = sand.u32 %s68, 1
        %s184 = smul.addr %s183, 8
        %s185 = scalar_lea.vmem [#allocation5], %s184
        // Predicated region
        $region29: #{tpu_custom_call.1} parent=23 // pred_check
          %p186 = pneg %p78
        $region30: #{tpu_custom_call.1} parent=23 // pred_check_branch
          %188 = sbr.rel (%p186) target = $region32
        $region31: #{tpu_custom_call.1} parent=23 // pred_region
          %s190 = ssub.s32 128, 128
          %191 = vsyncadd %s182, %s190
          %s192 = smul.addr %s22, 2
          %s193 = sadd.s32 %s23, %s192
          %s194 = smul.addr %s193, 128
          %s195 = scalar_lea.hbm %s1, %s194
          %s197 = sshll.u32 %s185, 4
          %s198 = int_to_ptr.vmem [resolvable:$true] %s197
          %200 = dma.vmem_to_hbm [thread:$0]  %s198, 128, %s195, %s182
        $region32: #{tpu_custom_call.1} parent=23 // pred_fallthru
          _
      $region24: #{tpu_custom_call.1} parent=5 // pred_fallthru
        _
      %p201 = scmp.le.s32.totalorder 2, %s13
      // Predicated region
      $region33: #{tpu_custom_call.1} parent=5 // pred_check
        %p202 = pneg %p201
      $region34: #{tpu_custom_call.1} parent=5 // pred_check_branch
        %204 = sbr.rel (%p202) target = $region36
      $region35: #{tpu_custom_call.1} parent=5 // pred_region
        %s205 = ssub.s32 %s13, 2
        // Predicated region
        $region37: #{tpu_custom_call.1} parent=35 // pred_check
          %p206 = pneg %p84
        $region38: #{tpu_custom_call.1} parent=35 // pred_check_branch
          %208 = sbr.rel (%p206) target = $region40
        $region39: #{tpu_custom_call.1} parent=35 // pred_region
          %s209 = sand.u32 %s69, 1
          %s210 = scalar_lea.sflag [#allocation4], %s209
          %s211 = sand.u32 %s69, 1
          %s212 = smul.addr %s211, 8
          %s213 = scalar_lea.vmem [#allocation5], %s212
          %214 = dma.done %s210, 128
        $region40: #{tpu_custom_call.1} parent=35 // pred_fallthru
          _
      $region36: #{tpu_custom_call.1} parent=5 // pred_fallthru
        _
    $region6: #{tpu_custom_call.1} parent=1 // loop_footer
      %s17 = sadd.s32 1, %s13
    $region7: #{tpu_custom_call.1} parent=1 // loop_footer_branch
      %12 = sbr.rel target = $region3
    $region8: #{tpu_custom_call.1} parent=1 // loop_exit
      _
    %215 = vsyncpa [#allocation3], 1
    %s216 = scalar_lea.sflag [#allocation3], 1
    %217 = vsyncpa %s216, 1
    %218 = vsyncpa [#allocation4], 1
    %s219 = scalar_lea.sflag [#allocation4], 1
    %220 = vsyncpa %s219, 1

</llo_original>
